<compile_context>
chip_gen: v7x
topology: tpu7x:2x2x1
jax: 0.10.0
libtpu: 0.0.40
codegen_flags: <defaults>
</compile_context>

<pallas_src>
import functools

import jax
import jax.numpy as jnp
from jax.experimental import pallas as pl
from jax.experimental.pallas import tpu as pltpu


# --------------------------------------------------------------------------
# Row-tiling helper.  Last two block dims must be (8, 128)-divisible or equal
# the full array extent; we never tile H (lane axis), so only rows need care.
# --------------------------------------------------------------------------
def _row_tile(rows, tile_m):
    if rows <= 8:
        return rows, rows                       # single block == full extent
    tile = max(8, (min(tile_m, rows) // 8) * 8)  # multiple of 8 sublanes
    rows_padded = pl.cdiv(rows, tile) * tile
    return tile, rows_padded


def _pad_rows(x2d, rows_padded):
    rows = x2d.shape[0]
    if rows_padded == rows:
        return x2d
    return jnp.pad(x2d, ((0, rows_padded - rows), (0, 0)))


# --------------------------------------------------------------------------
# Fused kernel: LayerNorm prologue -> MXU matmul (resident W) -> bias +
# residual epilogue.  Dropout is identity in eval mode.
# --------------------------------------------------------------------------
def _fused_ln_linear_residual_kernel(x_ref, a_ref, b_ref, w_ref, bias_ref,
                                     o_ref, *, eps):
    # ---- LayerNorm (f32 VPU/XLU math; unbiased std, eps added to std) ----
    x = x_ref[...].astype(jnp.float32)                      # (tile_m, H)
    h = x.shape[-1]
    mean = jnp.mean(x, axis=-1, keepdims=True)
    diff = x - mean
    var_unbiased = jnp.sum(diff * diff, axis=-1, keepdims=True) / (h - 1)
    std = jnp.sqrt(var_unbiased)
    inv = pl.reciprocal(std + eps, approx=True)              # EUP slot, ~free
    normed = (a_ref[...].astype(jnp.float32) * diff * inv
              + b_ref[...].astype(jnp.float32))

    # ---- Linear sublayer on the MXU: bf16 inputs, f32 accumulation ----
    acc = jnp.dot(normed.astype(w_ref.dtype), w_ref[...],
                  preferred_element_type=jnp.float32)        # (tile_m, N)

    # ---- bias + residual epilogue (dropout == identity in eval mode) ----
    o_ref[...] = (acc + bias_ref[...].astype(jnp.float32) + x).astype(o_ref.dtype)


def sublayer_connection_linear(x, a_2, b_2, w, bias, *, eps=1e-6, tile_m=512,
                               matmul_dtype=jnp.bfloat16):
    """x: (B, S, H). Fused  x + Linear(LayerNorm(x))  (eval-mode dropout)."""
    B, S, H = x.shape
    N = w.shape[1]
    assert w.shape[0] == H and N == H, "residual fusion requires Linear(H, H)"
    rows = B * S
    x2d = x.reshape(rows, H)
    tile, rows_padded = _row_tile(rows, tile_m)
    x2d_p = _pad_rows(x2d, rows_padded)
    grid = (rows_padded // tile,)

    out2d = pl.pallas_call(
        functools.partial(_fused_ln_linear_residual_kernel, eps=eps),
        out_shape=jax.ShapeDtypeStruct((rows_padded, N), x.dtype),
        grid_spec=pl.GridSpec(
            grid=grid,
            in_specs=[
                pl.BlockSpec((tile, H), lambda i: (i, 0)),   # x rows (streamed)
                pl.BlockSpec((1, H), lambda i: (0, 0)),      # gamma (resident)
                pl.BlockSpec((1, H), lambda i: (0, 0)),      # beta  (resident)
                pl.BlockSpec((H, N), lambda i: (0, 0)),      # W     (resident, bf16)
                pl.BlockSpec((1, N), lambda i: (0, 0)),      # bias  (resident)
            ],
            out_specs=pl.BlockSpec((tile, N), lambda i: (i, 0)),
        ),
        compiler_params=pltpu.CompilerParams(
            dimension_semantics=("parallel",),               # megacore on v7x
        ),
    )(x2d_p, a_2.reshape(1, H), b_2.reshape(1, H),
      w.astype(matmul_dtype), bias.reshape(1, N).astype(jnp.float32))
    return out2d[:rows].reshape(B, S, H)


# --------------------------------------------------------------------------
# Generic (unfused) path for an arbitrary sublayer callable: row-tiled,
# pipelined LayerNorm kernel + user callable + row-tiled residual-add kernel.
# --------------------------------------------------------------------------
def _layernorm_kernel(x_ref, a_ref, b_ref, o_ref, *, eps):
    x = x_ref[...].astype(jnp.float32)
    h = x.shape[-1]
    mean = jnp.mean(x, axis=-1, keepdims=True)
    diff = x - mean
    var_unbiased = jnp.sum(diff * diff, axis=-1, keepdims=True) / (h - 1)
    inv = pl.reciprocal(jnp.sqrt(var_unbiased) + eps, approx=True)
    out = a_ref[...].astype(jnp.float32) * diff * inv + b_ref[...].astype(jnp.float32)
    o_ref[...] = out.astype(o_ref.dtype)


def layernorm(x2d, a_2, b_2, *, eps=1e-6, tile_m=512):
    rows, H = x2d.shape
    tile, rows_padded = _row_tile(rows, tile_m)
    x2d_p = _pad_rows(x2d, rows_padded)
    out = pl.pallas_call(
        functools.partial(_layernorm_kernel, eps=eps),
        out_shape=jax.ShapeDtypeStruct((rows_padded, H), x2d.dtype),
        grid_spec=pl.GridSpec(
            grid=(rows_padded // tile,),
            in_specs=[pl.BlockSpec((tile, H), lambda i: (i, 0)),
                      pl.BlockSpec((1, H), lambda i: (0, 0)),
                      pl.BlockSpec((1, H), lambda i: (0, 0))],
            out_specs=pl.BlockSpec((tile, H), lambda i: (i, 0)),
        ),
        compiler_params=pltpu.CompilerParams(dimension_semantics=("parallel",)),
    )(x2d_p, a_2.reshape(1, H), b_2.reshape(1, H))
    return out[:rows]


def _residual_kernel(x_ref, y_ref, o_ref):
    o_ref[...] = x_ref[...] + y_ref[...].astype(x_ref.dtype)


def residual_add(x2d, y2d, *, tile_m=512):
    rows, H = x2d.shape
    tile, rows_padded = _row_tile(rows, tile_m)
    out = pl.pallas_call(
        _residual_kernel,
        out_shape=jax.ShapeDtypeStruct((rows_padded, H), x2d.dtype),
        grid_spec=pl.GridSpec(
            grid=(rows_padded // tile,),
            in_specs=[pl.BlockSpec((tile, H), lambda i: (i, 0)),
                      pl.BlockSpec((tile, H), lambda i: (i, 0))],
            out_specs=pl.BlockSpec((tile, H), lambda i: (i, 0)),
        ),
        compiler_params=pltpu.CompilerParams(dimension_semantics=("parallel",)),
    )(_pad_rows(x2d, rows_padded), _pad_rows(y2d, rows_padded))
    return out[:rows]


def sublayer_connection(x, a_2, b_2, sublayer_fn, *, eps=1e-6, tile_m=512):
    """Generic path: arbitrary sublayer callable (cannot be fused)."""
    B, S, H = x.shape
    x2d = x.reshape(B * S, H)
    normed = layernorm(x2d, a_2, b_2, eps=eps, tile_m=tile_m)
    sub_out = sublayer_fn(normed)                 # (B*S, H) -> (B*S, H)
    return residual_add(x2d, sub_out, tile_m=tile_m).reshape(B, S, H)


if __name__ == "__main__":
    # H = 128 keeps every block lane-dense; tile_m=8 gives a 2-step pipelined grid
    # at this toy size (rows = B*S = 16).
    B, S, H = 2, 8, 128
    eps = 1e-6
    key = jax.random.PRNGKey(0)
    kx, kw, kb = jax.random.split(key, 3)

    x = jax.random.normal(kx, (B, S, H), dtype=jnp.float32)

    # LayerNorm params per __init__: a_2 = ones, b_2 = zeros.
    a_2 = jnp.ones((H,), dtype=jnp.float32)
    b_2 = jnp.zeros((H,), dtype=jnp.float32)

    # Deterministic example sublayer: Linear(H, H).
    w = (jax.random.normal(kw, (H, H), dtype=jnp.float32) / jnp.sqrt(H)).astype(jnp.float32)
    bias = jax.random.normal(kb, (H,), dtype=jnp.float32) * 0.01

    out = sublayer_connection_linear(x, a_2, b_2, w, bias, eps=eps, tile_m=8)
    jax.block_until_ready(out)

    # Reference: f32 LN (unbiased std, eps on std) + bf16-input / f32-acc matmul.
    mean = x.mean(-1, keepdims=True)
    diff = x - mean
    std = jnp.sqrt((diff * diff).sum(-1, keepdims=True) / (H - 1))
    normed_ref = a_2 * diff / (std + eps) + b_2
    sub_ref = jnp.dot(normed_ref.reshape(B * S, H).astype(jnp.bfloat16),
                      w.astype(jnp.bfloat16),
                      preferred_element_type=jnp.float32) + bias
    ref = x + sub_ref.reshape(B, S, H)
    assert jnp.allclose(out, ref, atol=2e-2, rtol=2e-2), \
        float(jnp.max(jnp.abs(out - ref)))

    # Sanity-check the generic (unfused) path with the same Linear as a callable.
    sub_fn = lambda y2d: (jnp.dot(y2d.astype(jnp.bfloat16), w.astype(jnp.bfloat16),
                                  preferred_element_type=jnp.float32) + bias
                          ).astype(x.dtype)
    out_gen = sublayer_connection(x, a_2, b_2, sub_fn, eps=eps, tile_m=8)
    jax.block_until_ready(out_gen)
    assert jnp.allclose(out_gen, ref, atol=2e-2, rtol=2e-2), \
        float(jnp.max(jnp.abs(out_gen - ref)))

    print("KERNEL_OK")
</pallas_src>

<mosaic_0001>
module attributes {stable_mosaic.version = 11 : i64} {
  func.func @_fused_ln_linear_residual_kernel(%arg0: i32, %arg1: memref<8x128xf32, #tpu.memory_space<vmem>>, %arg2: memref<1x128xf32, #tpu.memory_space<vmem>>, %arg3: memref<1x128xf32, #tpu.memory_space<vmem>>, %arg4: memref<128x128xbf16, #tpu.memory_space<vmem>>, %arg5: memref<1x128xf32, #tpu.memory_space<vmem>>, %arg6: memref<8x128xf32, #tpu.memory_space<vmem>>) attributes {dimension_semantics = [#tpu.dimension_semantics<parallel>], iteration_bounds = array<i64: 2>, scalar_prefetch = 0 : i64, scratch_operands = 0 : i64, tpu.core_type = #tpu.core_type<tc>, window_params = [{transform_indices = @transform_0, window_bounds = array<i64: 8, 128>}, {pipeline_mode = #tpu.pipeline_mode<synchronous>, transform_indices = @transform_1, window_bounds = array<i64: 1, 128>}, {pipeline_mode = #tpu.pipeline_mode<synchronous>, transform_indices = @transform_2, window_bounds = array<i64: 1, 128>}, {pipeline_mode = #tpu.pipeline_mode<synchronous>, transform_indices = @transform_3, window_bounds = array<i64: 128, 128>}, {pipeline_mode = #tpu.pipeline_mode<synchronous>, transform_indices = @transform_4, window_bounds = array<i64: 1, 128>}, {transform_indices = @transform_5, window_bounds = array<i64: 8, 128>}]} {
    %c0 = arith.constant 0 : index
    %c0_0 = arith.constant 0 : index
    %0 = vector.load %arg1[%c0, %c0_0] : memref<8x128xf32, #tpu.memory_space<vmem>>, vector<8x128xf32>
    %cst = arith.constant dense<0.000000e+00> : vector<8xf32>
    %1 = vector.multi_reduction <add>, %0, %cst [1] : vector<8x128xf32> to vector<8xf32>
    %2 = vector.shape_cast %1 : vector<8xf32> to vector<8x1xf32>
    %cst_1 = arith.constant 1.280000e+02 : f32
    %3 = vector.broadcast %cst_1 : f32 to vector<8x1xf32>
    %4 = arith.divf %2, %3 : vector<8x1xf32>
    %5 = vector.broadcast %4 : vector<8x1xf32> to vector<8x128xf32>
    %6 = arith.subf %0, %5 : vector<8x128xf32>
    %7 = arith.mulf %6, %6 : vector<8x128xf32>
    %cst_2 = arith.constant dense<0.000000e+00> : vector<8xf32>
    %8 = vector.multi_reduction <add>, %7, %cst_2 [1] : vector<8x128xf32> to vector<8xf32>
    %9 = vector.shape_cast %8 : vector<8xf32> to vector<8x1xf32>
    %cst_3 = arith.constant 1.270000e+02 : f32
    %10 = vector.broadcast %cst_3 : f32 to vector<8x1xf32>
    %11 = arith.divf %9, %10 : vector<8x1xf32>
    %12 = math.sqrt %11 : vector<8x1xf32>
    %cst_4 = arith.constant 9.99999997E-7 : f32
    %13 = vector.broadcast %cst_4 : f32 to vector<8x1xf32>
    %14 = arith.addf %12, %13 : vector<8x1xf32>
    %15 = tpu.reciprocal %14 {approx = true} : vector<8x1xf32> -> vector<8x1xf32>
    %c0_5 = arith.constant 0 : index
    %c0_6 = arith.constant 0 : index
    %16 = vector.load %arg2[%c0_5, %c0_6] : memref<1x128xf32, #tpu.memory_space<vmem>>, vector<1x128xf32>
    %17 = vector.broadcast %16 : vector<1x128xf32> to vector<8x128xf32>
    %18 = arith.mulf %17, %6 : vector<8x128xf32>
    %19 = vector.broadcast %15 : vector<8x1xf32> to vector<8x128xf32>
    %20 = arith.mulf %18, %19 : vector<8x128xf32>
    %c0_7 = arith.constant 0 : index
    %c0_8 = arith.constant 0 : index
    %21 = vector.load %arg3[%c0_7, %c0_8] : memref<1x128xf32, #tpu.memory_space<vmem>>, vector<1x128xf32>
    %22 = vector.broadcast %21 : vector<1x128xf32> to vector<8x128xf32>
    %23 = arith.addf %20, %22 : vector<8x128xf32>
    %24 = arith.truncf %23 : vector<8x128xf32> to vector<8x128xbf16>
    %c0_9 = arith.constant 0 : index
    %c0_10 = arith.constant 0 : index
    %25 = vector.load %arg4[%c0_9, %c0_10] : memref<128x128xbf16, #tpu.memory_space<vmem>>, vector<128x128xbf16>
    %cst_11 = arith.constant dense<0.000000e+00> : vector<8x128xf32>
    %26 = tpu.matmul %24, %25, %cst_11 {dimension_numbers = #tpu.dot_dimension_numbers<[1], [0], [0], [1], [0, 0, 1, 1], [], []>} : vector<8x128xbf16>, vector<128x128xbf16>, vector<8x128xf32> -> vector<8x128xf32>
    %c0_12 = arith.constant 0 : index
    %c0_13 = arith.constant 0 : index
    %27 = vector.load %arg5[%c0_12, %c0_13] : memref<1x128xf32, #tpu.memory_space<vmem>>, vector<1x128xf32>
    %28 = vector.broadcast %27 : vector<1x128xf32> to vector<8x128xf32>
    %29 = arith.addf %26, %28 : vector<8x128xf32>
    %30 = arith.addf %29, %0 : vector<8x128xf32>
    %c0_14 = arith.constant 0 : index
    %c0_15 = arith.constant 0 : index
    %31 = vector.load %arg6[%c0_14, %c0_15] : memref<8x128xf32, #tpu.memory_space<vmem>>, vector<8x128xf32>
    tpu.vector_store %arg6[%c0_14, %c0_15], %30 {strides = array<i32>} : memref<8x128xf32, #tpu.memory_space<vmem>>, vector<8x128xf32>,
    return
  }
  func.func @transform_0(%arg0: i32) -> (i32, i32) {
    %c0_i32 = arith.constant 0 : i32
    %c0_i32_0 = arith.constant 0 : i32
    return %arg0, %c0_i32 : i32, i32
  }
  func.func @transform_1(%arg0: i32) -> (i32, i32) {
    %c0_i32 = arith.constant 0 : i32
    %c0_i32_0 = arith.constant 0 : i32
    %c0_i32_1 = arith.constant 0 : i32
    return %c0_i32, %c0_i32_0 : i32, i32
  }
  func.func @transform_2(%arg0: i32) -> (i32, i32) {
    %c0_i32 = arith.constant 0 : i32
    %c0_i32_0 = arith.constant 0 : i32
    %c0_i32_1 = arith.constant 0 : i32
    return %c0_i32, %c0_i32_0 : i32, i32
  }
  func.func @transform_3(%arg0: i32) -> (i32, i32) {
    %c0_i32 = arith.constant 0 : i32
    %c0_i32_0 = arith.constant 0 : i32
    %c0_i32_1 = arith.constant 0 : i32
    return %c0_i32, %c0_i32_0 : i32, i32
  }
  func.func @transform_4(%arg0: i32) -> (i32, i32) {
    %c0_i32 = arith.constant 0 : i32
    %c0_i32_0 = arith.constant 0 : i32
    %c0_i32_1 = arith.constant 0 : i32
    return %c0_i32, %c0_i32_0 : i32, i32
  }
  func.func @transform_5(%arg0: i32) -> (i32, i32) {
    %c0_i32 = arith.constant 0 : i32
    %c0_i32_0 = arith.constant 0 : i32
    return %arg0, %c0_i32 : i32, i32
  }
}

</mosaic_0001>

<llo_original>
// kernel: tpu_custom_call.1
$region0: #{tpu_custom_call.1}
  #allocation0 [shape = 'u32[]', space=smem, size = 0x4, offset = 0x4, fixed_abs, tag = 'smem constant byte address 0x4 - core index']
  #allocation1 [shape = 'u32[144,128]{1,0:T(1,128)}', space=vmem, size = 0x12000, scoped, tag = 'internal scratch']
  %s0 = inlined_call_operand.hbm [shape: f32[16,128], index: 0, kind: input, shape index: {}]
  %s1 = inlined_call_operand.vmem [shape: f32[1,128], index: 1, kind: input, shape index: {}]
  %s2 = inlined_call_operand.vmem [shape: f32[1,128], index: 2, kind: input, shape index: {}]
  %s3 = inlined_call_operand.hbm [shape: bf16[128,128], index: 3, kind: input, shape index: {}]
  %s4 = inlined_call_operand.vmem [shape: f32[1,128], index: 4, kind: input, shape index: {}]
  %s5 = inlined_call_operand.hbm [shape: f32[16,128], index: 5, kind: output, shape index: {}]
  %s6 = sld [smem:[#allocation0]]
  $region61: #{tpu_custom_call.1} parent=0
    _
  %s8 = ssub.s32 1, %s6
  %s9 = scalar_select 0, %s8, %s6
  $region1: #{tpu_custom_call.1} parent=0
    #allocation2 [shape = 'u8[8192]{0}', space=vmem, size = 0x2000, scoped, tag = 'input window, operand 0']
    #allocation3 [shape = 's32[2]{0}', space=sflag, size = 0x8, scoped, tag = 'scoped memory for tpu_custom_call.1']
    #allocation4 [shape = 's32[2]{0}', space=sflag, size = 0x8, scoped, tag = 'scoped memory for tpu_custom_call.1']
    #allocation5 [shape = 'u8[32768]{0}', space=vmem, size = 0x8000, scoped, tag = 'input window, operand 3, single buffered']
    #allocation6 [shape = 's32[1]{0}', space=sflag, size = 0x4, scoped, tag = 'scoped memory for tpu_custom_call.1']
    #allocation7 [shape = 'u8[8192]{0}', space=vmem, size = 0x2000, scoped, tag = 'output window, operand 0']
    %10 = vsyncpa [#allocation3], 0
    %s11 = scalar_lea.sflag [#allocation3], 1
    %12 = vsyncpa %s11, 0
    %13 = vsyncpa [#allocation6], 0
    %14 = vsyncpa [#allocation4], 0
    %s15 = scalar_lea.sflag [#allocation4], 1
    %16 = vsyncpa %s15, 0
    loop: start=0, step=1, limit=4
    $region2: #{tpu_custom_call.1} parent=1 // loop_pre_header
      _
    $region3: #{tpu_custom_call.1} parent=1 // loop_header
      %s18 = sphi 0, %s22
      %p19 = scmp.ge.s32.totalorder %s18, 4
      %s28 = sphi 0, %s30
      %s31 = sphi 0, %s28
      %s32 = sphi 0, %s31
      %s48 = sphi 0, %s32
      %s52 = sphi 0, %s52
      %s54 = sphi 0, %s52
      %s55 = sphi 0, %s54
      %s69 = sphi 0, %s55
      %s73 = sphi 0, %s73
      %s75 = sphi 0, %s73
      %s76 = sphi 0, %s75
      %s90 = sphi 0, %s76
      %s94 = sphi 0, %s94
      %s96 = sphi 0, %s94
      %s97 = sphi 0, %s96
      %s111 = sphi 0, %s97
      %s115 = sphi 0, %s115
      %s117 = sphi 0, %s115
      %s118 = sphi 0, %s117
      %s132 = sphi 0, %s118
      %s138 = sphi 0, %s140
      %s141 = sphi 0, %s138
      %s142 = sphi 0, %s141
      %s158 = sphi 0, %s142
    $region4: #{tpu_custom_call.1} parent=1 // loop_header_branch
      %21 = sbr.rel (%p19) target = $region8
    $region5: #{tpu_custom_call.1} parent=1 // loop_body
      %s23 = ssub.s32 %s18, 1
      %s24 = ssub.s32 %s18, 2
      %s25 = sadd.s32 %s18, 1
      %s26 = ssub.s32 %s18, %s25
      %p27 = scmp.eq.s32.totalorder %s26, 0
      %s29 = sadd.s32 %s28, 1
      %s30 = scalar_select %p27, %s28, %s29
      %p33 = pneg %p27
      %p34 = scmp.eq.s32.totalorder %s18, 1
      %p35 = por %p33, %p34
      %p36 = scmp.ne.s32.totalorder %s28, %s31
      %p37 = scmp.eq.s32.totalorder %s18, 0
      %p38 = por %p36, %p37
      %p39 = scmp.ne.s32.totalorder %s28, %s31
      %p40 = scmp.eq.s32.totalorder %s23, 1
      %p41 = por %p39, %p40
      %p42 = scmp.ne.s32.totalorder %s31, %s32
      %p43 = scmp.eq.s32.totalorder %s23, 0
      %p44 = por %p42, %p43
      %p45 = scmp.ne.s32.totalorder %s31, %s32
      %p46 = scmp.eq.s32.totalorder %s24, 1
      %p47 = por %p45, %p46
      %p49 = scmp.ne.s32.totalorder %s32, %s48
      %p50 = scmp.eq.s32.totalorder %s24, 0
      %p51 = por %p49, %p50
      %s53 = sadd.s32 %s52, 1
      %p56 = scmp.eq.s32.totalorder %s18, 1
      %p57 = scmp.ne.s32.totalorder %s52, %s54
      %p58 = scmp.eq.s32.totalorder %s18, 0
      %p59 = por %p57, %p58
      %p60 = scmp.ne.s32.totalorder %s52, %s54
      %p61 = scmp.eq.s32.totalorder %s23, 1
      %p62 = por %p60, %p61
      %p63 = scmp.ne.s32.totalorder %s54, %s55
      %p64 = scmp.eq.s32.totalorder %s23, 0
      %p65 = por %p63, %p64
      %p66 = scmp.ne.s32.totalorder %s54, %s55
      %p67 = scmp.eq.s32.totalorder %s24, 1
      %p68 = por %p66, %p67
      %p70 = scmp.ne.s32.totalorder %s55, %s69
      %p71 = scmp.eq.s32.totalorder %s24, 0
      %p72 = por %p70, %p71
      %s74 = sadd.s32 %s73, 1
      %p77 = scmp.eq.s32.totalorder %s18, 1
      %p78 = scmp.ne.s32.totalorder %s73, %s75
      %p79 = scmp.eq.s32.totalorder %s18, 0
      %p80 = por %p78, %p79
      %p81 = scmp.ne.s32.totalorder %s73, %s75
      %p82 = scmp.eq.s32.totalorder %s23, 1
      %p83 = por %p81, %p82
      %p84 = scmp.ne.s32.totalorder %s75, %s76
      %p85 = scmp.eq.s32.totalorder %s23, 0
      %p86 = por %p84, %p85
      %p87 = scmp.ne.s32.totalorder %s75, %s76
      %p88 = scmp.eq.s32.totalorder %s24, 1
      %p89 = por %p87, %p88
      %p91 = scmp.ne.s32.totalorder %s76, %s90
      %p92 = scmp.eq.s32.totalorder %s24, 0
      %p93 = por %p91, %p92
      %s95 = sadd.s32 %s94, 1
      %p98 = scmp.eq.s32.totalorder %s18, 1
      %p99 = scmp.ne.s32.totalorder %s94, %s96
      %p100 = scmp.eq.s32.totalorder %s18, 0
      %p101 = por %p99, %p100
      %p102 = scmp.ne.s32.totalorder %s94, %s96
      %p103 = scmp.eq.s32.totalorder %s23, 1
      %p104 = por %p102, %p103
      %p105 = scmp.ne.s32.totalorder %s96, %s97
      %p106 = scmp.eq.s32.totalorder %s23, 0
      %p107 = por %p105, %p106
      %p108 = scmp.ne.s32.totalorder %s96, %s97
      %p109 = scmp.eq.s32.totalorder %s24, 1
      %p110 = por %p108, %p109
      %p112 = scmp.ne.s32.totalorder %s97, %s111
      %p113 = scmp.eq.s32.totalorder %s24, 0
      %p114 = por %p112, %p113
      %s116 = sadd.s32 %s115, 1
      %p119 = scmp.eq.s32.totalorder %s18, 1
      %p120 = scmp.ne.s32.totalorder %s115, %s117
      %p121 = scmp.eq.s32.totalorder %s18, 0
      %p122 = por %p120, %p121
      %p123 = scmp.ne.s32.totalorder %s115, %s117
      %p124 = scmp.eq.s32.totalorder %s23, 1
      %p125 = por %p123, %p124
      %p126 = scmp.ne.s32.totalorder %s117, %s118
      %p127 = scmp.eq.s32.totalorder %s23, 0
      %p128 = por %p126, %p127
      %p129 = scmp.ne.s32.totalorder %s117, %s118
      %p130 = scmp.eq.s32.totalorder %s24, 1
      %p131 = por %p129, %p130
      %p133 = scmp.ne.s32.totalorder %s118, %s132
      %p134 = scmp.eq.s32.totalorder %s24, 0
      %p135 = por %p133, %p134
      %s136 = ssub.s32 %s18, %s25
      %p137 = scmp.eq.s32.totalorder %s136, 0
      %s139 = sadd.s32 %s138, 1
      %s140 = scalar_select %p137, %s138, %s139
      %p143 = pneg %p137
      %p144 = scmp.eq.s32.totalorder %s18, 1
      %p145 = por %p143, %p144
      %p146 = scmp.ne.s32.totalorder %s138, %s141
      %p147 = scmp.eq.s32.totalorder %s18, 0
      %p148 = por %p146, %p147
      %p149 = scmp.ne.s32.totalorder %s138, %s141
      %p150 = scmp.eq.s32.totalorder %s23, 1
      %p151 = por %p149, %p150
      %p152 = scmp.ne.s32.totalorder %s141, %s142
      %p153 = scmp.eq.s32.totalorder %s23, 0
      %p154 = por %p152, %p153
      %p155 = scmp.ne.s32.totalorder %s141, %s142
      %p156 = scmp.eq.s32.totalorder %s24, 1
      %p157 = por %p155, %p156
      %p159 = scmp.ne.s32.totalorder %s142, %s158
      %p160 = scmp.eq.s32.totalorder %s24, 0
      %p161 = por %p159, %p160
      %p162 = scmp.le.s32.totalorder 1, %s18
      %p163 = scmp.lt.s32.totalorder %s18, 3
      %p164 = pnand %p162, %p163
      %p165 = pneg %p164
      // Predicated region
      $region9: #{tpu_custom_call.1} parent=5 // pred_check
        _
      $region10: #{tpu_custom_call.1} parent=5 // pred_check_branch
        %167 = sbr.rel (%p164) target = $region12
      $region11: #{tpu_custom_call.1} parent=5 // pred_region
        %s168 = ssub.s32 %s18, 1
        // Predicated region
        $region13: #{tpu_custom_call.1} parent=11 // pred_check
          %p169 = pneg %p65
        $region14: #{tpu_custom_call.1} parent=11 // pred_check_branch
          %171 = sbr.rel (%p169) target = $region16
        $region15: #{tpu_custom_call.1} parent=11 // pred_region
          _
        $region16: #{tpu_custom_call.1} parent=11 // pred_fallthru
          _
        // Predicated region
        $region17: #{tpu_custom_call.1} parent=11 // pred_check
          %p172 = pneg %p86
        $region18: #{tpu_custom_call.1} parent=11 // pred_check_branch
          %174 = sbr.rel (%p172) target = $region20
        $region19: #{tpu_custom_call.1} parent=11 // pred_region
          _
        $region20: #{tpu_custom_call.1} parent=11 // pred_fallthru
          _
        // Predicated region
        $region21: #{tpu_custom_call.1} parent=11 // pred_check
          %p175 = pneg %p107
        $region22: #{tpu_custom_call.1} parent=11 // pred_check_branch
          %177 = sbr.rel (%p175) target = $region24
        $region23: #{tpu_custom_call.1} parent=11 // pred_region
          %s179 = ssub.s32 1024, 1024
          %180 = vsyncadd [#allocation6], %s179
          %s181 = sshll.u32 [#allocation5], 4
          %s182 = int_to_ptr.vmem [resolvable:$true] %s181
          %187 = dma.hbm_to_vmem [thread:$0]  %s3, 1024, %s182, [#allocation6], 64, 64, 4
        $region24: #{tpu_custom_call.1} parent=11 // pred_fallthru
          _
        // Predicated region
        $region25: #{tpu_custom_call.1} parent=11 // pred_check
          %p188 = pneg %p128
        $region26: #{tpu_custom_call.1} parent=11 // pred_check_branch
          %190 = sbr.rel (%p188) target = $region28
        $region27: #{tpu_custom_call.1} parent=11 // pred_region
          _
        $region28: #{tpu_custom_call.1} parent=11 // pred_fallthru
          _
      $region12: #{tpu_custom_call.1} parent=5 // pred_fallthru
        _
      %p191 = scmp.lt.s32.totalorder %s18, 2
      // Predicated region
      $region29: #{tpu_custom_call.1} parent=5 // pred_check
        %p192 = pneg %p191
      $region30: #{tpu_custom_call.1} parent=5 // pred_check_branch
        %194 = sbr.rel (%p192) target = $region32
      $region31: #{tpu_custom_call.1} parent=5 // pred_region
        // Predicated region
        $region33: #{tpu_custom_call.1} parent=31 // pred_check
          %p195 = pneg %p38
        $region34: #{tpu_custom_call.1} parent=31 // pred_check_branch
          %197 = sbr.rel (%p195) target = $region36
        $region35: #{tpu_custom_call.1} parent=31 // pred_region
          %s198 = sand.u32 %s28, 1
          %s199 = scalar_lea.sflag [#allocation3], %s198
          %s200 = sand.u32 %s28, 1
          %s201 = smul.addr %s200, 8
          %s202 = scalar_lea.vmem [#allocation2], %s201
          %s204 = ssub.s32 128, 128
          %205 = vsyncadd %s199, %s204
          %s206 = smul.addr %s18, 128
          %s207 = scalar_lea.hbm %s0, %s206
          %s209 = sshll.u32 %s202, 4
          %s210 = int_to_ptr.vmem [resolvable:$true] %s209
          %212 = dma.hbm_to_vmem [thread:$0]  %s207, 128, %s210, %s199
        $region36: #{tpu_custom_call.1} parent=31 // pred_fallthru
          _
      $region32: #{tpu_custom_call.1} parent=5 // pred_fallthru
        _
      %p213 = scmp.le.s32.totalorder 1, %s18
      %p214 = scmp.lt.s32.totalorder %s18, 3
      %p215 = pnand %p213, %p214
      %p216 = pneg %p215
      // Predicated region
      $region37: #{tpu_custom_call.1} parent=5 // pred_check
        _
      $region38: #{tpu_custom_call.1} parent=5 // pred_check_branch
        %218 = sbr.rel (%p215) target = $region40
      $region39: #{tpu_custom_call.1} parent=5 // pred_region
        %s219 = ssub.s32 %s18, 1
        %s220 = sand.u32 %s31, 1
        %s221 = scalar_lea.sflag [#allocation3], %s220
        %s222 = sand.u32 %s31, 1
        %s223 = smul.addr %s222, 8
        %s224 = scalar_lea.vmem [#allocation2], %s223
        // Predicated region
        $region41: #{tpu_custom_call.1} parent=39 // pred_check
          %p225 = pneg %p44
        $region42: #{tpu_custom_call.1} parent=39 // pred_check_branch
          %227 = sbr.rel (%p225) target = $region44
        $region43: #{tpu_custom_call.1} parent=39 // pred_region
          %228 = dma.done %s221, 128
        $region44: #{tpu_custom_call.1} parent=39 // pred_fallthru
          _
        // Predicated region
        $region45: #{tpu_custom_call.1} parent=39 // pred_check
          %p229 = pneg %p107
        $region46: #{tpu_custom_call.1} parent=39 // pred_check_branch
          %231 = sbr.rel (%p229) target = $region48
        $region47: #{tpu_custom_call.1} parent=39 // pred_region
          %232 = dma.done [#allocation6], 1024
        $region48: #{tpu_custom_call.1} parent=39 // pred_fallthru
          _
        %s233 = sand.u32 %s31, 1
        %s234 = scalar_lea.sflag [#allocation3], %s233
        %s235 = sand.u32 %s31, 1
        %s236 = smul.addr %s235, 8
        %s237 = scalar_lea.vmem [#allocation2], %s236
        %p238 = pneg %p44
        %p239 = pneg %p41
        %p240 = pneg %p65
        %p241 = pneg %p62
        %p242 = pneg %p86
        %p243 = pneg %p83
        %p244 = pneg %p107
        %p245 = pneg %p104
        %p246 = pneg %p128
        %p247 = pneg %p125
        %p248 = pneg %p154
        %p249 = pneg %p151
        %s250 = sand.u32 %s141, 1
        %s251 = scalar_lea.sflag [#allocation4], %s250
        %s252 = sand.u32 %s141, 1
        %s253 = smul.addr %s252, 8
        %s254 = scalar_lea.vmem [#allocation7], %s253
        %v256 = vld [vmem:[%s224] sm:$0xff]
        %257 = vadd.xlane.f32.xlu0 %v256
        %v258 = vpop.xlane.xlu0 %257
        %v259 = vrcp.pop 128.0
        %v260 = vmul.f32 %v258, %v259
        %v261 = vsub.f32 %v256, %v260
        %v262 = vmul.f32 %v261, %v261
        %263 = vadd.xlane.f32.xlu0 %v262
        %v264 = vpop.xlane.xlu0 %263
        %v265 = vrcp.pop 127.0
        %v266 = vmul.f32 %v264, %v265
        %v267 = vrsqrt.pop %v266
        %v268 = vmul.f32 %v266, %v267
        %vm269 = vcmp.eq.f32.partialorder %v266, inf
        %v270 = vsel %vm269, %v266, %v268
        %vm271 = vcmp.eq.f32.partialorder %v266, 0.0
        %v272 = vand.u32 %v266, 2147483648
        %v273 = vsel %vm271, %v272, %v270
        %v274 = vadd.f32 %v273, 1e-06
        %v275 = vrcp.pop %v274
        %v276 = vld [vmem:[%s1] sm:$0x1]
        %v278 = vlaneseq
        %v279 = vshrl.u32 %v278, 7
        %v280 = vsub.s32 0, %v279
        %v281 = vrot.slane %v276, %v280
        %v283 = vmul.f32 %v281, %v261
        %v284 = vmul.f32 %v283, %v275
        %v285 = vld [vmem:[%s2] sm:$0x1]
        %v287 = vlaneseq
        %v288 = vshrl.u32 %v287, 7
        %v289 = vsub.s32 0, %v288
        %v290 = vrot.slane %v285, %v289
        %v292 = vadd.f32 %v284, %v290
        %v293 = vpack.c.bf16 %v292, %v292
        %v294 = vld [vmem:[#allocation5] sm:$0xf]
        %v295 = vld [vmem:[#allocation5 + $0x4] sm:$0xf]
        %v296 = vld [vmem:[#allocation5 + $0x8] sm:$0xf]
        %v297 = vld [vmem:[#allocation5 + $0xc] sm:$0xf]
        %v298 = vld [vmem:[#allocation5 + $0x10] sm:$0xf]
        %v299 = vld [vmem:[#allocation5 + $0x14] sm:$0xf]
        %v300 = vld [vmem:[#allocation5 + $0x18] sm:$0xf]
        %v301 = vld [vmem:[#allocation5 + $0x1c] sm:$0xf]
        %v302 = vld [vmem:[#allocation5 + $0x20] sm:$0xf]
        %v303 = vld [vmem:[#allocation5 + $0x24] sm:$0xf]
        %v304 = vld [vmem:[#allocation5 + $0x28] sm:$0xf]
        %v305 = vld [vmem:[#allocation5 + $0x2c] sm:$0xf]
        %v306 = vld [vmem:[#allocation5 + $0x30] sm:$0xf]
        %v307 = vld [vmem:[#allocation5 + $0x34] sm:$0xf]
        %v308 = vld [vmem:[#allocation5 + $0x38] sm:$0xf]
        %v309 = vld [vmem:[#allocation5 + $0x3c] sm:$0xf]
        %v310 = vld [vmem:[%s4] sm:$0x1]
        %v312 = vlaneseq
        %v313 = vshrl.u32 %v312, 7
        %v314 = vsub.s32 0, %v313
        %v315 = vrot.slane %v310, %v314
        %v333 = vunpack.c.l.b16 %v294
        %v334 = vunpack.c.l.b16 %v295
        %v335 = vunpack.c.l.b16 %v296
        %v336 = vunpack.c.l.b16 %v297
        %v337 = vunpack.c.l.b16 %v298
        %v338 = vunpack.c.l.b16 %v299
        %v339 = vunpack.c.l.b16 %v300
        %v340 = vunpack.c.l.b16 %v301
        %v341 = vunpack.c.l.b16 %v302
        %v342 = vunpack.c.l.b16 %v303
        %v343 = vunpack.c.l.b16 %v304
        %v344 = vunpack.c.l.b16 %v305
        %v345 = vunpack.c.l.b16 %v306
        %v346 = vunpack.c.l.b16 %v307
        %v347 = vunpack.c.l.b16 %v308
        %v348 = vunpack.c.l.b16 %v309
        %v349 = vpack.c.b16 %v334, %v333
        %v350 = vpack.c.b16 %v336, %v335
        %v351 = vpack.c.b16 %v338, %v337
        %v352 = vpack.c.b16 %v340, %v339
        %v353 = vpack.c.b16 %v342, %v341
        %v354 = vpack.c.b16 %v344, %v343
        %v355 = vpack.c.b16 %v346, %v345
        %v356 = vpack.c.b16 %v348, %v347
        %365 = vmatprep.subr.bf16.mxu0 0
        %366 = vmatpush1.bf16.msra.mxu0 %v349
        %367 = vmatprep.subr.bf16.mxu0 0
        %368 = vmatpush1.bf16.msra.mxu0 %v350
        %369 = vmatprep.subr.bf16.mxu0 0
        %370 = vmatpush1.bf16.msra.mxu0 %v351
        %371 = vmatprep.subr.bf16.mxu0 0
        %372 = vmatpush1.bf16.msra.mxu0 %v352
        %373 = vmatprep.subr.bf16.mxu0 0
        %374 = vmatpush1.bf16.msra.mxu0 %v353
        %375 = vmatprep.subr.bf16.mxu0 0
        %376 = vmatpush1.bf16.msra.mxu0 %v354
        %377 = vmatprep.subr.bf16.mxu0 0
        %378 = vmatpush1.bf16.msra.mxu0 %v355
        %379 = vmatprep.subr.bf16.mxu0 0
        %380 = vmatpush1.bf16.msra.mxu0 %v356
        %381 = vmatprep.subr.bf16.mxu0 0
        %382 = vmatpush1.bf16.msra.mxu0 0
        %383 = vmatprep.subr.bf16.mxu0 0
        %384 = vmatpush1.bf16.msra.mxu0 0
        %385 = vmatprep.subr.bf16.mxu0 0
        %386 = vmatpush1.bf16.msra.mxu0 0
        %387 = vmatprep.subr.bf16.mxu0 0
        %388 = vmatpush1.bf16.msra.mxu0 0
        %389 = vmatprep.subr.bf16.mxu0 0
        %390 = vmatpush1.bf16.msra.mxu0 0
        %391 = vmatprep.subr.bf16.mxu0 0
        %392 = vmatpush1.bf16.msra.mxu0 0
        %393 = vmatprep.subr.bf16.mxu0 0
        %394 = vmatpush1.bf16.msra.mxu0 0
        %395 = vmatprep.subr.bf16.mxu0 0
        %396 = vmatpush1.bf16.msra.mxu0 0
        %397 = vmatprep.mubr.bf16.mxu0 0
        %398 = vmatmul.mubr.bf16.gmra.mrb[0].mxu0 %v293
        %v399 = vpop.f32.mrb[0].mxu0
        %v400 = vadd.f32 %v315, %v399
        %v401 = vpop.f32.mrb[0].mxu0
        %v402 = vpop.f32.mrb[0].mxu0
        %v403 = vpop.f32.mrb[0].mxu0
        %404 = vdwg.mxu0
        %v405 = vadd.f32 %v400, %v256
        %406 = vst [vmem:[%s254] sm:$0xff] %v405
        %s407 = sand.u32 %s141, 1
        %s408 = scalar_lea.sflag [#allocation4], %s407
        %s409 = sand.u32 %s141, 1
        %s410 = smul.addr %s409, 8
        %s411 = scalar_lea.vmem [#allocation7], %s410
        // Predicated region
        $region49: #{tpu_custom_call.1} parent=39 // pred_check
          %p412 = pneg %p151
        $region50: #{tpu_custom_call.1} parent=39 // pred_check_branch
          %414 = sbr.rel (%p412) target = $region52
        $region51: #{tpu_custom_call.1} parent=39 // pred_region
          %s416 = ssub.s32 128, 128
          %417 = vsyncadd %s408, %s416
          %s418 = smul.addr %s23, 128
          %s419 = scalar_lea.hbm %s5, %s418
          %s421 = sshll.u32 %s411, 4
          %s422 = int_to_ptr.vmem [resolvable:$true] %s421
          %424 = dma.vmem_to_hbm [thread:$0]  %s422, 128, %s419, %s408
        $region52: #{tpu_custom_call.1} parent=39 // pred_fallthru
          _
      $region40: #{tpu_custom_call.1} parent=5 // pred_fallthru
        _
      %p425 = scmp.le.s32.totalorder 2, %s18
      // Predicated region
      $region53: #{tpu_custom_call.1} parent=5 // pred_check
        %p426 = pneg %p425
      $region54: #{tpu_custom_call.1} parent=5 // pred_check_branch
        %428 = sbr.rel (%p426) target = $region56
      $region55: #{tpu_custom_call.1} parent=5 // pred_region
        %s429 = ssub.s32 %s18, 2
        // Predicated region
        $region57: #{tpu_custom_call.1} parent=55 // pred_check
          %p430 = pneg %p157
        $region58: #{tpu_custom_call.1} parent=55 // pred_check_branch
          %432 = sbr.rel (%p430) target = $region60
        $region59: #{tpu_custom_call.1} parent=55 // pred_region
          %s433 = sand.u32 %s142, 1
          %s434 = scalar_lea.sflag [#allocation4], %s433
          %s435 = sand.u32 %s142, 1
          %s436 = smul.addr %s435, 8
          %s437 = scalar_lea.vmem [#allocation7], %s436
          %438 = dma.done %s434, 128
        $region60: #{tpu_custom_call.1} parent=55 // pred_fallthru
          _
      $region56: #{tpu_custom_call.1} parent=5 // pred_fallthru
        _
    $region6: #{tpu_custom_call.1} parent=1 // loop_footer
      %s22 = sadd.s32 1, %s18
    $region7: #{tpu_custom_call.1} parent=1 // loop_footer_branch
      %17 = sbr.rel target = $region3
    $region8: #{tpu_custom_call.1} parent=1 // loop_exit
      _
    %439 = vsyncpa [#allocation3], 1
    %s440 = scalar_lea.sflag [#allocation3], 1
    %441 = vsyncpa %s440, 1
    %442 = vsyncpa [#allocation6], 1
    %443 = vsyncpa [#allocation4], 1
    %s444 = scalar_lea.sflag [#allocation4], 1
    %445 = vsyncpa %s444, 1

</llo_original>
